<compile_context>
chip_gen: v5e
topology: v5e:2x2
jax: 0.10.0
libtpu: 0.0.40
codegen_flags: <defaults>
</compile_context>

<pallas_src>
import functools

import jax
import jax.numpy as jnp
from jax.experimental import pallas as pl
from jax.experimental.pallas import tpu as pltpu


def _round_up(x, m):
    return ((x + m - 1) // m) * m


# ----------------------------------------------------------------------------
# Pallas kernel 1: per-image 9-tap conv (in-VMEM im2col) with fused BN stats.
#
# The padded image is stored flat as (Hrows, Cin) rows (row = padded pixel,
# lanes = channels).  Output "pixel" (h, w) lives at row h*Wp + w, so tap
# (kh, kw) of the 3x3 window is the row slice starting at kh*Wp + kw -- a
# constant offset -> 9 shifted-slice matmuls, no patch materialization.
# Rows with w >= W (2 junk columns per padded row) are masked out of the stats
# and sliced away in the wrapper.
# ----------------------------------------------------------------------------
def _conv_tap_kernel(x_ref, w_ref, m_ref, o_ref, s_ref, q_ref, *, taps, mo):
    acc = None
    for t, off in enumerate(taps):
        a = x_ref[pl.ds(off, mo), :]                       # (mo, Cin) bf16
        d = jnp.dot(a, w_ref[t], preferred_element_type=jnp.float32)
        acc = d if acc is None else acc + d
    o_ref[...] = acc.astype(o_ref.dtype)

    # Mask junk rows before the BatchNorm batch statistics.
    ym = acc * m_ref[...]                                  # (mo,1) broadcast
    ce = acc.shape[1]
    # (8, C) sublane-aligned partials: pure elementwise adds, no per-step XLU
    # full reduce; the tiny final reduction happens in the wrapper.
    s_ref[...] = jnp.sum(ym.reshape(mo // 8, 8, ce), axis=0)
    q_ref[...] = jnp.sum((ym * ym).reshape(mo // 8, 8, ce), axis=0)


def _conv_vmem_limit(hrows, cin, ce, mo, out_bytes):
    ws = (2 * hrows * cin * 2          # padded image block, double-buffered bf16
          + 2 * 9 * cin * ce * 2       # resident tap weights
          + 2 * mo * ce * out_bytes    # output tile
          + 2 * mo * ce * 4            # f32 accumulator + masked copy
          + 2 * mo * 4                 # row-validity mask
          + 4 * 8 * ce * 4)            # stats tiles
    return int(min(64 * 1024 * 1024, max(32 * 1024 * 1024, 2 * ws)))


def conv_tap(x, w9, out_dtype=jnp.bfloat16):
    """3x3-tap convolution core.

    x:  (N, H, W, Cin) activation (any float dtype; cast to bf16 for the MXU).
    w9: (9, Cin, Ce) bf16 tap weights, tap order (kh, kw).
    Returns (y (N, H, W, Ce) out_dtype, col_sum (Ce,), col_sumsq (Ce,)) where the
    stats are per-column sums over the N*H*W valid output positions.
    Used both for Conv2d(3, pad=1) and for the phase-decomposed
    ConvTranspose2d(4, 2, 1) (Ce = 4*Cout, phases interleaved by the caller).
    """
    N, H, W, Cin = x.shape
    Ce = w9.shape[2]
    Wp, Hp = W + 2, H + 2
    Mo = _round_up(H * Wp, 8)
    Hrows = _round_up(max(Hp * Wp, 2 * Wp + 2 + Mo), 8)

    xp = jnp.pad(x.astype(jnp.bfloat16), ((0, 0), (1, 1), (1, 1), (0, 0)))
    xf = xp.reshape(N, Hp * Wp, Cin)
    xf = jnp.pad(xf, ((0, 0), (0, Hrows - Hp * Wp), (0, 0))).reshape(N * Hrows, Cin)

    ridx = jnp.arange(Mo)
    mask = (((ridx % Wp) < W) & (ridx < H * Wp)).astype(jnp.float32).reshape(Mo, 1)

    taps = tuple(kh * Wp + kw for kh in range(3) for kw in range(3))
    kern = functools.partial(_conv_tap_kernel, taps=taps, mo=Mo)
    out_bytes = jnp.dtype(out_dtype).itemsize

    y, s, q = pl.pallas_call(
        kern,
        out_shape=(jax.ShapeDtypeStruct((N * Mo, Ce), out_dtype),
                   jax.ShapeDtypeStruct((N * 8, Ce), jnp.float32),
                   jax.ShapeDtypeStruct((N * 8, Ce), jnp.float32)),
        grid_spec=pltpu.PrefetchScalarGridSpec(
            num_scalar_prefetch=0,
            grid=(N,),
            in_specs=[pl.BlockSpec((Hrows, Cin), lambda n: (n, 0)),
                      pl.BlockSpec((9, Cin, Ce), lambda n: (0, 0, 0)),
                      pl.BlockSpec((Mo, 1), lambda n: (0, 0))],
            out_specs=(pl.BlockSpec((Mo, Ce), lambda n: (n, 0)),
                       pl.BlockSpec((8, Ce), lambda n: (n, 0)),
                       pl.BlockSpec((8, Ce), lambda n: (n, 0)))),
        compiler_params=pltpu.CompilerParams(
            dimension_semantics=("parallel",),
            vmem_limit_bytes=_conv_vmem_limit(Hrows, Cin, Ce, Mo, out_bytes)),
    )(xf, w9.astype(jnp.bfloat16), mask)

    # Drop junk columns / trailing pad rows (bf16 layout glue in XLA).
    y = y.reshape(N, Mo, Ce)[:, :H * Wp, :].reshape(N, H, Wp, Ce)[:, :, :W, :]
    s = s.reshape(N, 8, Ce).sum(axis=(0, 1))
    q = q.reshape(N, 8, Ce).sum(axis=(0, 1))
    return y, s, q


# ----------------------------------------------------------------------------
# Pallas kernel 2: tiny matmul + fused stats (used only for convt1: 1x1 input).
# ----------------------------------------------------------------------------
def _mm_stats_kernel(a_ref, b_ref, o_ref, s_ref, q_ref):
    y = jnp.dot(a_ref[...], b_ref[...], preferred_element_type=jnp.float32)
    o_ref[...] = y.astype(o_ref.dtype)
    c = y.shape[-1]
    s_ref[...] = jnp.sum(y.reshape(-1, 8, c), axis=0)
    q_ref[...] = jnp.sum((y * y).reshape(-1, 8, c), axis=0)


def matmul_stats(a, b, out_dtype=jnp.bfloat16):
    """a: (M, K), b: (K, Ncol) bf16.  Returns (a @ b, col_sum, col_sumsq)."""
    M, K = a.shape
    _, Ncol = b.shape
    Mp = _round_up(M, 8)
    a_p = jnp.pad(a.astype(jnp.bfloat16), ((0, Mp - M), (0, 0)))
    y, s, q = pl.pallas_call(
        _mm_stats_kernel,
        out_shape=(jax.ShapeDtypeStruct((Mp, Ncol), out_dtype),
                   jax.ShapeDtypeStruct((8, Ncol), jnp.float32),
                   jax.ShapeDtypeStruct((8, Ncol), jnp.float32)),
        grid_spec=pltpu.PrefetchScalarGridSpec(
            num_scalar_prefetch=0,
            grid=(1,),
            in_specs=[pl.BlockSpec((Mp, K), lambda i: (0, 0)),
                      pl.BlockSpec((K, Ncol), lambda i: (0, 0))],
            out_specs=(pl.BlockSpec((Mp, Ncol), lambda i: (0, 0)),
                       pl.BlockSpec((8, Ncol), lambda i: (0, 0)),
                       pl.BlockSpec((8, Ncol), lambda i: (0, 0)))),
        compiler_params=pltpu.CompilerParams(
            dimension_semantics=("arbitrary",)),
    )(a_p, b.astype(jnp.bfloat16))
    return y[:M], s.sum(0), q.sum(0)


# ----------------------------------------------------------------------------
# Pallas kernel 3: fused lane-dense BN-affine (+ ReLU) (+ residual) (+ tanh).
# All arithmetic in f32; cast only at the store.
# ----------------------------------------------------------------------------
def _bn_act_kernel(*refs, relu, tanh, add_res):
    if add_res:
        x_ref, sc_ref, sh_ref, r_ref, o_ref = refs
    else:
        x_ref, sc_ref, sh_ref, o_ref = refs
    y = x_ref[...].astype(jnp.float32) * sc_ref[...] + sh_ref[...]
    if relu:
        y = jnp.maximum(y, 0.0)
    if add_res:
        y = y + r_ref[...].astype(jnp.float32)
    if tanh:
        y = jnp.tanh(y)
    o_ref[...] = y.astype(o_ref.dtype)


def bn_act(x, scale, shift, res=None, relu=False, tanh=False,
           out_dtype=jnp.bfloat16):
    """x, res: (N, H, W, C); scale/shift: (C,) f32.  Lane-dense, row-tiled."""
    N, H, W, C = x.shape
    total = N * H * W * C
    if (W * C) % 128 == 0:
        L = W * C
    elif (H * W * C) % 128 == 0:
        L = H * W * C                      # e.g. nc=3 layers: 64*64*3 = 12288
    else:
        L = W * C                          # fallback (masked stores, correct)
    R = total // L

    x2 = x.reshape(R, L)
    sc2 = jnp.tile(scale.astype(jnp.float32), L // C).reshape(1, L)
    sh2 = jnp.tile(shift.astype(jnp.float32), L // C).reshape(1, L)

    max_rows = max(8, (2 << 20) // (4 * L))        # ~2 MiB f32 per operand block
    if R <= max_rows:
        tr, Rp = R, R
    else:
        tr = max(8, (max_rows // 8) * 8)
        Rp = _round_up(R, tr)
    if Rp != R:
        x2 = jnp.pad(x2, ((0, Rp - R), (0, 0)))

    add_res = res is not None
    args = [x2, sc2, sh2]
    in_specs = [pl.BlockSpec((tr, L), lambda i: (i, 0)),
                pl.BlockSpec((1, L), lambda i: (0, 0)),
                pl.BlockSpec((1, L), lambda i: (0, 0))]
    if add_res:
        r2 = res.reshape(R, L)
        if Rp != R:
            r2 = jnp.pad(r2, ((0, Rp - R), (0, 0)))
        args.append(r2)
        in_specs.append(pl.BlockSpec((tr, L), lambda i: (i, 0)))

    kern = functools.partial(_bn_act_kernel, relu=relu, tanh=tanh,
                             add_res=add_res)
    out = pl.pallas_call(
        kern,
        out_shape=jax.ShapeDtypeStruct((Rp, L), out_dtype),
        grid_spec=pltpu.PrefetchScalarGridSpec(
            num_scalar_prefetch=0,
            grid=(Rp // tr,),
            in_specs=in_specs,
            out_specs=pl.BlockSpec((tr, L), lambda i: (i, 0))),
        compiler_params=pltpu.CompilerParams(
            dimension_semantics=("parallel",)),
    )(*args)
    if Rp != R:
        out = out[:R]
    return out.reshape(N, H, W, C)


# ----------------------------------------------------------------------------
# Weight packing (done once at init) & small helpers
# ----------------------------------------------------------------------------
# Kernel-tap index per (output phase, local 2-tap window offset) for K=4, s=2, p=1.
_KTAP = ((3, 1), (2, 0))


def _convt_phase_weight(w):
    """w: (Cin, Cout, 4, 4) ConvTranspose2d weight -> (9*Cin, 4*Cout).

    Rows ordered (Dh, Dw, ci) over a 3x3 window of the 1-padded input; columns
    ordered (ph, pw, co) over the 4 output phases.  Output pixel
    (2r+ph, 2c+pw) = patch(r, c) . column(ph, pw, :)."""
    Cin, Cout = w.shape[0], w.shape[1]
    zero = jnp.zeros((Cin, Cout), w.dtype)
    cols = []
    for ph in range(2):
        for pw in range(2):
            taps = []
            for Dh in range(3):
                for Dw in range(3):
                    dh, dw = Dh - ph, Dw - pw
                    if 0 <= dh <= 1 and 0 <= dw <= 1:
                        taps.append(w[:, :, _KTAP[ph][dh], _KTAP[pw][dw]])
                    else:
                        taps.append(zero)
            cols.append(jnp.concatenate(taps, axis=0))           # (9*Cin, Cout)
    return jnp.concatenate(cols, axis=1)                         # (9*Cin, 4*Cout)


def _interleave_phases(y_pm, cout):
    """(N, H, W, 4*cout) phase-major (ph, pw, co) -> (N, 2H, 2W, cout)."""
    N, H, W, _ = y_pm.shape
    return (y_pm.reshape(N, H, W, 2, 2, cout)
                .transpose(0, 1, 3, 2, 4, 5)
                .reshape(N, 2 * H, 2 * W, cout))


def bn_scale_shift(s, sq, count, gamma, beta, eps=1e-5):
    """Training-mode BatchNorm2d affine from fused batch statistics."""
    mean = s / count
    var = jnp.maximum(sq / count - mean * mean, 0.0)   # biased variance
    scale = gamma * jax.lax.rsqrt(var + eps)
    shift = beta - mean * scale
    return scale, shift


# ----------------------------------------------------------------------------
# Parameters & forward
# ----------------------------------------------------------------------------
def init_params(key, n_input, ngf, nc):
    keys = iter(jax.random.split(key, 64))

    def w(shape, scl=0.05):
        return scl * jax.random.normal(next(keys), shape, jnp.float32)

    def bn(c):
        g = 1.0 + 0.1 * jax.random.normal(next(keys), (c,), jnp.float32)
        b = 0.1 * jax.random.normal(next(keys), (c,), jnp.float32)
        return g, b

    chans = [ngf * 8, ngf * 4, ngf * 2, ngf, nc]
    p = {}
    in_c = n_input
    for i, c in enumerate(chans, start=1):
        wt = w((in_c, c, 4, 4))                       # ConvTranspose2d (bias=False)
        if i == 1:
            p["convt1_wm"] = (jnp.transpose(wt, (0, 2, 3, 1))
                              .reshape(in_c, 16 * c).astype(jnp.bfloat16))
        else:
            p[f"convt{i}_w9"] = (_convt_phase_weight(wt)
                                 .reshape(9, in_c, 4 * c).astype(jnp.bfloat16))
        for j in (1, 2):
            wc = w((c, c, 3, 3))                      # Conv2d (bias cancels under BN)
            p[f"conv{i}_{j}_w9"] = (jnp.transpose(wc, (2, 3, 1, 0))
                                    .reshape(9, c, c).astype(jnp.bfloat16))
        p[f"bn{i}_res_1_g"], p[f"bn{i}_res_1_b"] = bn(c)
        p[f"bn{i}_res_2_g"], p[f"bn{i}_res_2_b"] = bn(c)
        if i <= 4:
            p[f"bn{i}_g"], p[f"bn{i}_b"] = bn(c)
        in_c = c
    return p


def _res_block(p, i, t):
    """x = t + relu(bn_res_2(conv_2(relu(bn_res_1(conv_1(t))))))  (blocks 1-4)
       y = tanh(t + bn5_res_2(conv5_2(relu(bn5_res_1(conv5_1(t))))))  (block 5)."""
    N, H, W, _ = t.shape
    count = N * H * W
    last = (i == 5)

    r, s, q = conv_tap(t, p[f"conv{i}_1_w9"])
    sc, sh = bn_scale_shift(s, q, count, p[f"bn{i}_res_1_g"], p[f"bn{i}_res_1_b"])
    r = bn_act(r, sc, sh, relu=True)

    r, s, q = conv_tap(r, p[f"conv{i}_2_w9"])
    sc, sh = bn_scale_shift(s, q, count, p[f"bn{i}_res_2_g"], p[f"bn{i}_res_2_b"])
    if last:
        return bn_act(r, sc, sh, res=t, relu=False, tanh=True,
                      out_dtype=jnp.float32)
    return bn_act(r, sc, sh, res=t, relu=True)


def netG_forward(p, z_nchw):
    N = z_nchw.shape[0]
    n_input = z_nchw.shape[1]

    # ---- block 1: convt1 on the 1x1 input is a plain matmul ----
    c1 = p["bn1_g"].shape[0]
    z2 = z_nchw.reshape(N, n_input).astype(jnp.bfloat16)
    y, s, q = matmul_stats(z2, p["convt1_wm"])                 # (N, 16*c1) bf16
    s = s.reshape(16, c1).sum(0)
    q = q.reshape(16, c1).sum(0)
    sc, sh = bn_scale_shift(s, q, N * 16, p["bn1_g"], p["bn1_b"])
    t = bn_act(y.reshape(N, 4, 4, c1), sc, sh, relu=True)      # (N,4,4,c1) bf16
    x = _res_block(p, 1, t)

    # ---- blocks 2-4: phase-decomposed stride-2 ConvTranspose + residual ----
    for i in (2, 3, 4):
        c = p[f"bn{i}_g"].shape[0]
        ypm, s4, q4 = conv_tap(x, p[f"convt{i}_w9"])           # (N,H,W,4c) bf16
        s = s4.reshape(4, c).sum(0)
        q = q4.reshape(4, c).sum(0)
        count = 4 * ypm.shape[0] * ypm.shape[1] * ypm.shape[2]
        sc, sh = bn_scale_shift(s, q, count, p[f"bn{i}_g"], p[f"bn{i}_b"])
        # BN+ReLU applied in phase-major layout (per-channel -> order invariant),
        # then the stride-2 interleave runs on bf16 data.
        tpm = bn_act(ypm, jnp.tile(sc, 4), jnp.tile(sh, 4), relu=True)
        t = _interleave_phases(tpm, c)
        x = _res_block(p, i, t)

    # ---- block 5: convt5 (no BN, no ReLU), residual, tanh ----
    nc_ = p["bn5_res_1_g"].shape[0]
    ypm, _, _ = conv_tap(x, p["convt5_w9"])
    t = _interleave_phases(ypm, nc_)                           # (N,64,64,nc) bf16
    y = _res_block(p, 5, t)                                    # f32, tanh'd

    return jnp.transpose(y, (0, 3, 1, 2))                      # NHWC -> NCHW


if __name__ == "__main__":
    key = jax.random.PRNGKey(0)

    # ---- golden-reference self-checks of the tap-conv kernel (bf16 inputs,
    #      f32 accumulation on both sides, so only summation order differs) ----
    xs = jax.random.normal(jax.random.fold_in(key, 1), (2, 6, 6, 16),
                           jnp.float32).astype(jnp.bfloat16)

    # (a) Conv2d(3, pad=1)
    wc = (0.2 * jax.random.normal(jax.random.fold_in(key, 2), (24, 16, 3, 3),
                                  jnp.float32)).astype(jnp.bfloat16)
    w9 = jnp.transpose(wc, (2, 3, 1, 0)).reshape(9, 16, 24)
    y_k, s_k, _ = conv_tap(xs, w9, out_dtype=jnp.float32)
    y_r = jax.lax.conv_general_dilated(
        xs.astype(jnp.float32), jnp.transpose(wc.astype(jnp.float32), (2, 3, 1, 0)),
        (1, 1), ((1, 1), (1, 1)), dimension_numbers=("NHWC", "HWIO", "NHWC"))
    rel = float(jnp.max(jnp.abs(y_k - y_r)) / (jnp.max(jnp.abs(y_r)) + 1e-6))
    assert rel < 2e-2, f"conv3x3 mismatch: {rel}"
    s_r = y_r.sum((0, 1, 2))
    rel = float(jnp.max(jnp.abs(s_k - s_r)) / (jnp.max(jnp.abs(s_r)) + 1e-6))
    assert rel < 2e-2, f"conv3x3 stats mismatch: {rel}"

    # (b) ConvTranspose2d(4, stride=2, pad=1) via phase decomposition
    wt = (0.2 * jax.random.normal(jax.random.fold_in(key, 3), (16, 12, 4, 4),
                                  jnp.float32)).astype(jnp.bfloat16)
    w9t = _convt_phase_weight(wt).reshape(9, 16, 48)
    ypm, _, _ = conv_tap(xs, w9t, out_dtype=jnp.float32)
    y_k = _interleave_phases(ypm, 12)
    w_flip = jnp.flip(wt.astype(jnp.float32), axis=(2, 3)).transpose(1, 0, 2, 3)
    y_r = jax.lax.conv_general_dilated(
        xs.astype(jnp.float32), jnp.transpose(w_flip, (2, 3, 1, 0)),
        (1, 1), ((2, 2), (2, 2)), lhs_dilation=(2, 2),
        dimension_numbers=("NHWC", "HWIO", "NHWC"))
    rel = float(jnp.max(jnp.abs(y_k - y_r)) / (jnp.max(jnp.abs(y_r)) + 1e-6))
    assert rel < 2e-2, f"convtranspose mismatch: {rel}"

    # ---- full generator forward at small demo shapes ----
    batch, n_input, ngf, nc = 2, 8, 8, 3
    params = init_params(jax.random.fold_in(key, 4), n_input, ngf, nc)
    z = jax.random.normal(jax.random.fold_in(key, 5),
                          (batch, n_input, 1, 1), jnp.float32)

    fwd = jax.jit(netG_forward)
    out = jax.block_until_ready(fwd(params, z))

    assert out.shape == (batch, nc, 64, 64), out.shape
    assert bool(jnp.all(jnp.isfinite(out)))
    assert bool(jnp.all(jnp.abs(out) <= 1.0 + 1e-6))   # tanh output range
    print("KERNEL_OK")
</pallas_src>

<mosaic_0001>
module attributes {stable_mosaic.version = 11 : i64} {
  func.func @_conv_tap_kernel(%arg0: i32, %arg1: memref<72x16xbf16, #tpu.memory_space<vmem>>, %arg2: memref<9x16x24xbf16, #tpu.memory_space<vmem>>, %arg3: memref<48x1xf32, #tpu.memory_space<vmem>>, %arg4: memref<48x24xf32, #tpu.memory_space<vmem>>, %arg5: memref<8x24xf32, #tpu.memory_space<vmem>>, %arg6: memref<8x24xf32, #tpu.memory_space<vmem>>) attributes {dimension_semantics = [#tpu.dimension_semantics<parallel>], iteration_bounds = array<i64: 2>, scalar_prefetch = 0 : i64, scratch_operands = 0 : i64, tpu.core_type = #tpu.core_type<tc>, window_params = [{transform_indices = @transform_0, window_bounds = array<i64: 72, 16>}, {pipeline_mode = #tpu.pipeline_mode<synchronous>, transform_indices = @transform_1, window_bounds = array<i64: 9, 16, 24>}, {pipeline_mode = #tpu.pipeline_mode<synchronous>, transform_indices = @transform_2, window_bounds = array<i64: 48, 1>}, {transform_indices = @transform_3, window_bounds = array<i64: 48, 24>}, {transform_indices = @transform_4, window_bounds = array<i64: 8, 24>}, {transform_indices = @transform_5, window_bounds = array<i64: 8, 24>}]} {
    %c0 = arith.constant 0 : index
    %c0_0 = arith.constant 0 : index
    %0 = vector.load %arg1[%c0, %c0_0] : memref<72x16xbf16, #tpu.memory_space<vmem>>, vector<48x16xbf16>
    %c0_1 = arith.constant 0 : index
    %c0_2 = arith.constant 0 : index
    %c0_3 = arith.constant 0 : index
    %1 = vector.load %arg2[%c0_1, %c0_2, %c0_3] : memref<9x16x24xbf16, #tpu.memory_space<vmem>>, vector<1x16x24xbf16>
    %2 = vector.shape_cast %1 : vector<1x16x24xbf16> to vector<16x24xbf16>
    %cst = arith.constant dense<0.000000e+00> : vector<48x24xf32>
    %3 = tpu.matmul %0, %2, %cst {dimension_numbers = #tpu.dot_dimension_numbers<[1], [0], [0], [1], [0, 0, 1, 1], [], []>} : vector<48x16xbf16>, vector<16x24xbf16>, vector<48x24xf32> -> vector<48x24xf32>
    %c1 = arith.constant 1 : index
    %c0_4 = arith.constant 0 : index
    %4 = vector.load %arg1[%c1, %c0_4] : memref<72x16xbf16, #tpu.memory_space<vmem>>, vector<48x16xbf16>
    %c1_5 = arith.constant 1 : index
    %c0_6 = arith.constant 0 : index
    %c0_7 = arith.constant 0 : index
    %5 = vector.load %arg2[%c1_5, %c0_6, %c0_7] : memref<9x16x24xbf16, #tpu.memory_space<vmem>>, vector<1x16x24xbf16>
    %6 = vector.shape_cast %5 : vector<1x16x24xbf16> to vector<16x24xbf16>
    %cst_8 = arith.constant dense<0.000000e+00> : vector<48x24xf32>
    %7 = tpu.matmul %4, %6, %cst_8 {dimension_numbers = #tpu.dot_dimension_numbers<[1], [0], [0], [1], [0, 0, 1, 1], [], []>} : vector<48x16xbf16>, vector<16x24xbf16>, vector<48x24xf32> -> vector<48x24xf32>
    %8 = arith.addf %3, %7 : vector<48x24xf32>
    %c2 = arith.constant 2 : index
    %c0_9 = arith.constant 0 : index
    %9 = vector.load %arg1[%c2, %c0_9] : memref<72x16xbf16, #tpu.memory_space<vmem>>, vector<48x16xbf16>
    %c2_10 = arith.constant 2 : index
    %c0_11 = arith.constant 0 : index
    %c0_12 = arith.constant 0 : index
    %10 = vector.load %arg2[%c2_10, %c0_11, %c0_12] : memref<9x16x24xbf16, #tpu.memory_space<vmem>>, vector<1x16x24xbf16>
    %11 = vector.shape_cast %10 : vector<1x16x24xbf16> to vector<16x24xbf16>
    %cst_13 = arith.constant dense<0.000000e+00> : vector<48x24xf32>
    %12 = tpu.matmul %9, %11, %cst_13 {dimension_numbers = #tpu.dot_dimension_numbers<[1], [0], [0], [1], [0, 0, 1, 1], [], []>} : vector<48x16xbf16>, vector<16x24xbf16>, vector<48x24xf32> -> vector<48x24xf32>
    %13 = arith.addf %8, %12 : vector<48x24xf32>
    %c8 = arith.constant 8 : index
    %c0_14 = arith.constant 0 : index
    %14 = vector.load %arg1[%c8, %c0_14] : memref<72x16xbf16, #tpu.memory_space<vmem>>, vector<48x16xbf16>
    %c3 = arith.constant 3 : index
    %c0_15 = arith.constant 0 : index
    %c0_16 = arith.constant 0 : index
    %15 = vector.load %arg2[%c3, %c0_15, %c0_16] : memref<9x16x24xbf16, #tpu.memory_space<vmem>>, vector<1x16x24xbf16>
    %16 = vector.shape_cast %15 : vector<1x16x24xbf16> to vector<16x24xbf16>
    %cst_17 = arith.constant dense<0.000000e+00> : vector<48x24xf32>
    %17 = tpu.matmul %14, %16, %cst_17 {dimension_numbers = #tpu.dot_dimension_numbers<[1], [0], [0], [1], [0, 0, 1, 1], [], []>} : vector<48x16xbf16>, vector<16x24xbf16>, vector<48x24xf32> -> vector<48x24xf32>
    %18 = arith.addf %13, %17 : vector<48x24xf32>
    %c9 = arith.constant 9 : index
    %c0_18 = arith.constant 0 : index
    %19 = vector.load %arg1[%c9, %c0_18] : memref<72x16xbf16, #tpu.memory_space<vmem>>, vector<48x16xbf16>
    %c4 = arith.constant 4 : index
    %c0_19 = arith.constant 0 : index
    %c0_20 = arith.constant 0 : index
    %20 = vector.load %arg2[%c4, %c0_19, %c0_20] : memref<9x16x24xbf16, #tpu.memory_space<vmem>>, vector<1x16x24xbf16>
    %21 = vector.shape_cast %20 : vector<1x16x24xbf16> to vector<16x24xbf16>
    %cst_21 = arith.constant dense<0.000000e+00> : vector<48x24xf32>
    %22 = tpu.matmul %19, %21, %cst_21 {dimension_numbers = #tpu.dot_dimension_numbers<[1], [0], [0], [1], [0, 0, 1, 1], [], []>} : vector<48x16xbf16>, vector<16x24xbf16>, vector<48x24xf32> -> vector<48x24xf32>
    %23 = arith.addf %18, %22 : vector<48x24xf32>
    %c10 = arith.constant 10 : index
    %c0_22 = arith.constant 0 : index
    %24 = vector.load %arg1[%c10, %c0_22] : memref<72x16xbf16, #tpu.memory_space<vmem>>, vector<48x16xbf16>
    %c5 = arith.constant 5 : index
    %c0_23 = arith.constant 0 : index
    %c0_24 = arith.constant 0 : index
    %25 = vector.load %arg2[%c5, %c0_23, %c0_24] : memref<9x16x24xbf16, #tpu.memory_space<vmem>>, vector<1x16x24xbf16>
    %26 = vector.shape_cast %25 : vector<1x16x24xbf16> to vector<16x24xbf16>
    %cst_25 = arith.constant dense<0.000000e+00> : vector<48x24xf32>
    %27 = tpu.matmul %24, %26, %cst_25 {dimension_numbers = #tpu.dot_dimension_numbers<[1], [0], [0], [1], [0, 0, 1, 1], [], []>} : vector<48x16xbf16>, vector<16x24xbf16>, vector<48x24xf32> -> vector<48x24xf32>
    %28 = arith.addf %23, %27 : vector<48x24xf32>
    %c16 = arith.constant 16 : index
    %c0_26 = arith.constant 0 : index
    %29 = vector.load %arg1[%c16, %c0_26] : memref<72x16xbf16, #tpu.memory_space<vmem>>, vector<48x16xbf16>
    %c6 = arith.constant 6 : index
    %c0_27 = arith.constant 0 : index
    %c0_28 = arith.constant 0 : index
    %30 = vector.load %arg2[%c6, %c0_27, %c0_28] : memref<9x16x24xbf16, #tpu.memory_space<vmem>>, vector<1x16x24xbf16>
    %31 = vector.shape_cast %30 : vector<1x16x24xbf16> to vector<16x24xbf16>
    %cst_29 = arith.constant dense<0.000000e+00> : vector<48x24xf32>
    %32 = tpu.matmul %29, %31, %cst_29 {dimension_numbers = #tpu.dot_dimension_numbers<[1], [0], [0], [1], [0, 0, 1, 1], [], []>} : vector<48x16xbf16>, vector<16x24xbf16>, vector<48x24xf32> -> vector<48x24xf32>
    %33 = arith.addf %28, %32 : vector<48x24xf32>
    %c17 = arith.constant 17 : index
    %c0_30 = arith.constant 0 : index
    %34 = vector.load %arg1[%c17, %c0_30] : memref<72x16xbf16, #tpu.memory_space<vmem>>, vector<48x16xbf16>
    %c7 = arith.constant 7 : index
    %c0_31 = arith.constant 0 : index
    %c0_32 = arith.constant 0 : index
    %35 = vector.load %arg2[%c7, %c0_31, %c0_32] : memref<9x16x24xbf16, #tpu.memory_space<vmem>>, vector<1x16x24xbf16>
    %36 = vector.shape_cast %35 : vector<1x16x24xbf16> to vector<16x24xbf16>
    %cst_33 = arith.constant dense<0.000000e+00> : vector<48x24xf32>
    %37 = tpu.matmul %34, %36, %cst_33 {dimension_numbers = #tpu.dot_dimension_numbers<[1], [0], [0], [1], [0, 0, 1, 1], [], []>} : vector<48x16xbf16>, vector<16x24xbf16>, vector<48x24xf32> -> vector<48x24xf32>
    %38 = arith.addf %33, %37 : vector<48x24xf32>
    %c18 = arith.constant 18 : index
    %c0_34 = arith.constant 0 : index
    %39 = vector.load %arg1[%c18, %c0_34] : memref<72x16xbf16, #tpu.memory_space<vmem>>, vector<48x16xbf16>
    %c8_35 = arith.constant 8 : index
    %c0_36 = arith.constant 0 : index
    %c0_37 = arith.constant 0 : index
    %40 = vector.load %arg2[%c8_35, %c0_36, %c0_37] : memref<9x16x24xbf16, #tpu.memory_space<vmem>>, vector<1x16x24xbf16>
    %41 = vector.shape_cast %40 : vector<1x16x24xbf16> to vector<16x24xbf16>
    %cst_38 = arith.constant dense<0.000000e+00> : vector<48x24xf32>
    %42 = tpu.matmul %39, %41, %cst_38 {dimension_numbers = #tpu.dot_dimension_numbers<[1], [0], [0], [1], [0, 0, 1, 1], [], []>} : vector<48x16xbf16>, vector<16x24xbf16>, vector<48x24xf32> -> vector<48x24xf32>
    %43 = arith.addf %38, %42 : vector<48x24xf32>
    %c0_39 = arith.constant 0 : index
    %c0_40 = arith.constant 0 : index
    %44 = vector.load %arg4[%c0_39, %c0_40] : memref<48x24xf32, #tpu.memory_space<vmem>>, vector<48x24xf32>
    tpu.vector_store %arg4[%c0_39, %c0_40], %43 {strides = array<i32>} : memref<48x24xf32, #tpu.memory_space<vmem>>, vector<48x24xf32>,
    %c0_41 = arith.constant 0 : index
    %c0_42 = arith.constant 0 : index
    %45 = vector.load %arg3[%c0_41, %c0_42] : memref<48x1xf32, #tpu.memory_space<vmem>>, vector<48x1xf32>
    %46 = vector.broadcast %45 : vector<48x1xf32> to vector<48x24xf32>
    %47 = arith.mulf %43, %46 : vector<48x24xf32>
    %48 = vector.shape_cast %47 : vector<48x24xf32> to vector<6x8x24xf32>
    %cst_43 = arith.constant dense<0.000000e+00> : vector<8x24xf32>
    %49 = vector.multi_reduction <add>, %48, %cst_43 [0] : vector<6x8x24xf32> to vector<8x24xf32>
    %c0_44 = arith.constant 0 : index
    %c0_45 = arith.constant 0 : index
    %50 = vector.load %arg5[%c0_44, %c0_45] : memref<8x24xf32, #tpu.memory_space<vmem>>, vector<8x24xf32>
    tpu.vector_store %arg5[%c0_44, %c0_45], %49 {strides = array<i32>} : memref<8x24xf32, #tpu.memory_space<vmem>>, vector<8x24xf32>,
    %51 = arith.mulf %47, %47 : vector<48x24xf32>
    %52 = vector.shape_cast %51 : vector<48x24xf32> to vector<6x8x24xf32>
    %cst_46 = arith.constant dense<0.000000e+00> : vector<8x24xf32>
    %53 = vector.multi_reduction <add>, %52, %cst_46 [0] : vector<6x8x24xf32> to vector<8x24xf32>
    %c0_47 = arith.constant 0 : index
    %c0_48 = arith.constant 0 : index
    %54 = vector.load %arg6[%c0_47, %c0_48] : memref<8x24xf32, #tpu.memory_space<vmem>>, vector<8x24xf32>
    tpu.vector_store %arg6[%c0_47, %c0_48], %53 {strides = array<i32>} : memref<8x24xf32, #tpu.memory_space<vmem>>, vector<8x24xf32>,
    return
  }
  func.func @transform_0(%arg0: i32) -> (i32, i32) {
    %c0_i32 = arith.constant 0 : i32
    %c0_i32_0 = arith.constant 0 : i32
    return %arg0, %c0_i32 : i32, i32
  }
  func.func @transform_1(%arg0: i32) -> (i32, i32, i32) {
    %c0_i32 = arith.constant 0 : i32
    %c0_i32_0 = arith.constant 0 : i32
    %c0_i32_1 = arith.constant 0 : i32
    %c0_i32_2 = arith.constant 0 : i32
    return %c0_i32, %c0_i32_0, %c0_i32_1 : i32, i32, i32
  }
  func.func @transform_2(%arg0: i32) -> (i32, i32) {
    %c0_i32 = arith.constant 0 : i32
    %c0_i32_0 = arith.constant 0 : i32
    %c0_i32_1 = arith.constant 0 : i32
    return %c0_i32, %c0_i32_0 : i32, i32
  }
  func.func @transform_3(%arg0: i32) -> (i32, i32) {
    %c0_i32 = arith.constant 0 : i32
    %c0_i32_0 = arith.constant 0 : i32
    return %arg0, %c0_i32 : i32, i32
  }
  func.func @transform_4(%arg0: i32) -> (i32, i32) {
    %c0_i32 = arith.constant 0 : i32
    %c0_i32_0 = arith.constant 0 : i32
    return %arg0, %c0_i32 : i32, i32
  }
  func.func @transform_5(%arg0: i32) -> (i32, i32) {
    %c0_i32 = arith.constant 0 : i32
    %c0_i32_0 = arith.constant 0 : i32
    return %arg0, %c0_i32 : i32, i32
  }
}

</mosaic_0001>

<llo_original>
// kernel: tpu_custom_call.1
$region0: #{tpu_custom_call.1}
  #allocation0 [shape = 'u32[]', space=smem, size = 0x4, offset = 0x4, fixed_abs, tag = 'smem constant byte address 0x4 - core index']
  #allocation1 [shape = 'u32[72,128]{1,0:T(1,128)}', space=vmem, size = 0x9000, scoped, tag = 'internal scratch']
  %s0 = inlined_call_operand.vmem [shape: bf16[144,16], index: 0, kind: input, shape index: {}]
  %s1 = inlined_call_operand.vmem [shape: bf16[9,16,24], index: 1, kind: input, shape index: {}]
  %s2 = inlined_call_operand.vmem [shape: f32[48,1], index: 2, kind: input, shape index: {}]
  %s3 = inlined_call_operand.vmem [shape: f32[96,24], index: 3, kind: output, shape index: {0}]
  %s4 = inlined_call_operand.hbm [shape: f32[16,24], index: 4, kind: output, shape index: {1}]
  %s5 = inlined_call_operand.hbm [shape: f32[16,24], index: 5, kind: output, shape index: {2}]
  %6 = xla_tuple %s3, %s4, %s5
  %s7 = sld [smem:[#allocation0]]
  $region61: #{tpu_custom_call.1} parent=0
    _
  %s9 = ssub.s32 1, %s7
  %s10 = scalar_select 0, %s9, %s7
  $region1: #{tpu_custom_call.1} parent=0
    #allocation2 [shape = 'u8[8192]{0}', space=vmem, size = 0x2000, scoped, tag = 'output window, operand 1']
    #allocation3 [shape = 's32[2]{0}', space=sflag, size = 0x8, scoped, tag = 'scoped memory for tpu_custom_call.1']
    #allocation4 [shape = 'u8[8192]{0}', space=vmem, size = 0x2000, scoped, tag = 'output window, operand 2']
    #allocation5 [shape = 's32[2]{0}', space=sflag, size = 0x8, scoped, tag = 'scoped memory for tpu_custom_call.1']
    %11 = vsyncpa [#allocation3], 0
    %s12 = scalar_lea.sflag [#allocation3], 1
    %13 = vsyncpa %s12, 0
    %14 = vsyncpa [#allocation5], 0
    %s15 = scalar_lea.sflag [#allocation5], 1
    %16 = vsyncpa %s15, 0
    loop: start=0, step=1, limit=4
    $region2: #{tpu_custom_call.1} parent=1 // loop_pre_header
      _
    $region3: #{tpu_custom_call.1} parent=1 // loop_header
      %s18 = sphi 0, %s22
      %p19 = scmp.ge.s32.totalorder %s18, 4
      %s28 = sphi 0, %s30
      %s31 = sphi 0, %s28
      %s32 = sphi 0, %s31
      %s48 = sphi 0, %s32
      %s52 = sphi 0, %s52
      %s54 = sphi 0, %s52
      %s55 = sphi 0, %s54
      %s69 = sphi 0, %s55
      %s73 = sphi 0, %s73
      %s75 = sphi 0, %s73
      %s76 = sphi 0, %s75
      %s90 = sphi 0, %s76
      %s96 = sphi 0, %s98
      %s99 = sphi 0, %s96
      %s100 = sphi 0, %s99
      %s116 = sphi 0, %s100
      %s122 = sphi 0, %s124
      %s125 = sphi 0, %s122
      %s126 = sphi 0, %s125
      %s142 = sphi 0, %s126
      %s148 = sphi 0, %s150
      %s151 = sphi 0, %s148
      %s152 = sphi 0, %s151
      %s168 = sphi 0, %s152
    $region4: #{tpu_custom_call.1} parent=1 // loop_header_branch
      %21 = sbr.rel (%p19) target = $region8
    $region5: #{tpu_custom_call.1} parent=1 // loop_body
      %s23 = ssub.s32 %s18, 1
      %s24 = ssub.s32 %s18, 2
      %s25 = sadd.s32 %s18, 1
      %s26 = ssub.s32 %s18, %s25
      %p27 = scmp.eq.s32.totalorder %s26, 0
      %s29 = sadd.s32 %s28, 1
      %s30 = scalar_select %p27, %s28, %s29
      %p33 = pneg %p27
      %p34 = scmp.eq.s32.totalorder %s18, 1
      %p35 = por %p33, %p34
      %p36 = scmp.ne.s32.totalorder %s28, %s31
      %p37 = scmp.eq.s32.totalorder %s18, 0
      %p38 = por %p36, %p37
      %p39 = scmp.ne.s32.totalorder %s28, %s31
      %p40 = scmp.eq.s32.totalorder %s23, 1
      %p41 = por %p39, %p40
      %p42 = scmp.ne.s32.totalorder %s31, %s32
      %p43 = scmp.eq.s32.totalorder %s23, 0
      %p44 = por %p42, %p43
      %p45 = scmp.ne.s32.totalorder %s31, %s32
      %p46 = scmp.eq.s32.totalorder %s24, 1
      %p47 = por %p45, %p46
      %p49 = scmp.ne.s32.totalorder %s32, %s48
      %p50 = scmp.eq.s32.totalorder %s24, 0
      %p51 = por %p49, %p50
      %s53 = sadd.s32 %s52, 1
      %p56 = scmp.eq.s32.totalorder %s18, 1
      %p57 = scmp.ne.s32.totalorder %s52, %s54
      %p58 = scmp.eq.s32.totalorder %s18, 0
      %p59 = por %p57, %p58
      %p60 = scmp.ne.s32.totalorder %s52, %s54
      %p61 = scmp.eq.s32.totalorder %s23, 1
      %p62 = por %p60, %p61
      %p63 = scmp.ne.s32.totalorder %s54, %s55
      %p64 = scmp.eq.s32.totalorder %s23, 0
      %p65 = por %p63, %p64
      %p66 = scmp.ne.s32.totalorder %s54, %s55
      %p67 = scmp.eq.s32.totalorder %s24, 1
      %p68 = por %p66, %p67
      %p70 = scmp.ne.s32.totalorder %s55, %s69
      %p71 = scmp.eq.s32.totalorder %s24, 0
      %p72 = por %p70, %p71
      %s74 = sadd.s32 %s73, 1
      %p77 = scmp.eq.s32.totalorder %s18, 1
      %p78 = scmp.ne.s32.totalorder %s73, %s75
      %p79 = scmp.eq.s32.totalorder %s18, 0
      %p80 = por %p78, %p79
      %p81 = scmp.ne.s32.totalorder %s73, %s75
      %p82 = scmp.eq.s32.totalorder %s23, 1
      %p83 = por %p81, %p82
      %p84 = scmp.ne.s32.totalorder %s75, %s76
      %p85 = scmp.eq.s32.totalorder %s23, 0
      %p86 = por %p84, %p85
      %p87 = scmp.ne.s32.totalorder %s75, %s76
      %p88 = scmp.eq.s32.totalorder %s24, 1
      %p89 = por %p87, %p88
      %p91 = scmp.ne.s32.totalorder %s76, %s90
      %p92 = scmp.eq.s32.totalorder %s24, 0
      %p93 = por %p91, %p92
      %s94 = ssub.s32 %s18, %s25
      %p95 = scmp.eq.s32.totalorder %s94, 0
      %s97 = sadd.s32 %s96, 1
      %s98 = scalar_select %p95, %s96, %s97
      %p101 = pneg %p95
      %p102 = scmp.eq.s32.totalorder %s18, 1
      %p103 = por %p101, %p102
      %p104 = scmp.ne.s32.totalorder %s96, %s99
      %p105 = scmp.eq.s32.totalorder %s18, 0
      %p106 = por %p104, %p105
      %p107 = scmp.ne.s32.totalorder %s96, %s99
      %p108 = scmp.eq.s32.totalorder %s23, 1
      %p109 = por %p107, %p108
      %p110 = scmp.ne.s32.totalorder %s99, %s100
      %p111 = scmp.eq.s32.totalorder %s23, 0
      %p112 = por %p110, %p111
      %p113 = scmp.ne.s32.totalorder %s99, %s100
      %p114 = scmp.eq.s32.totalorder %s24, 1
      %p115 = por %p113, %p114
      %p117 = scmp.ne.s32.totalorder %s100, %s116
      %p118 = scmp.eq.s32.totalorder %s24, 0
      %p119 = por %p117, %p118
      %s120 = ssub.s32 %s18, %s25
      %p121 = scmp.eq.s32.totalorder %s120, 0
      %s123 = sadd.s32 %s122, 1
      %s124 = scalar_select %p121, %s122, %s123
      %p127 = pneg %p121
      %p128 = scmp.eq.s32.totalorder %s18, 1
      %p129 = por %p127, %p128
      %p130 = scmp.ne.s32.totalorder %s122, %s125
      %p131 = scmp.eq.s32.totalorder %s18, 0
      %p132 = por %p130, %p131
      %p133 = scmp.ne.s32.totalorder %s122, %s125
      %p134 = scmp.eq.s32.totalorder %s23, 1
      %p135 = por %p133, %p134
      %p136 = scmp.ne.s32.totalorder %s125, %s126
      %p137 = scmp.eq.s32.totalorder %s23, 0
      %p138 = por %p136, %p137
      %p139 = scmp.ne.s32.totalorder %s125, %s126
      %p140 = scmp.eq.s32.totalorder %s24, 1
      %p141 = por %p139, %p140
      %p143 = scmp.ne.s32.totalorder %s126, %s142
      %p144 = scmp.eq.s32.totalorder %s24, 0
      %p145 = por %p143, %p144
      %s146 = ssub.s32 %s18, %s25
      %p147 = scmp.eq.s32.totalorder %s146, 0
      %s149 = sadd.s32 %s148, 1
      %s150 = scalar_select %p147, %s148, %s149
      %p153 = pneg %p147
      %p154 = scmp.eq.s32.totalorder %s18, 1
      %p155 = por %p153, %p154
      %p156 = scmp.ne.s32.totalorder %s148, %s151
      %p157 = scmp.eq.s32.totalorder %s18, 0
      %p158 = por %p156, %p157
      %p159 = scmp.ne.s32.totalorder %s148, %s151
      %p160 = scmp.eq.s32.totalorder %s23, 1
      %p161 = por %p159, %p160
      %p162 = scmp.ne.s32.totalorder %s151, %s152
      %p163 = scmp.eq.s32.totalorder %s23, 0
      %p164 = por %p162, %p163
      %p165 = scmp.ne.s32.totalorder %s151, %s152
      %p166 = scmp.eq.s32.totalorder %s24, 1
      %p167 = por %p165, %p166
      %p169 = scmp.ne.s32.totalorder %s152, %s168
      %p170 = scmp.eq.s32.totalorder %s24, 0
      %p171 = por %p169, %p170
      %p172 = scmp.le.s32.totalorder 1, %s18
      %p173 = scmp.lt.s32.totalorder %s18, 3
      %p174 = pnand %p172, %p173
      %p175 = pneg %p174
      // Predicated region
      $region9: #{tpu_custom_call.1} parent=5 // pred_check
        _
      $region10: #{tpu_custom_call.1} parent=5 // pred_check_branch
        %177 = sbr.rel (%p174) target = $region12
      $region11: #{tpu_custom_call.1} parent=5 // pred_region
        %s178 = ssub.s32 %s18, 1
        // Predicated region
        $region13: #{tpu_custom_call.1} parent=11 // pred_check
          %p179 = pneg %p65
        $region14: #{tpu_custom_call.1} parent=11 // pred_check_branch
          %181 = sbr.rel (%p179) target = $region16
        $region15: #{tpu_custom_call.1} parent=11 // pred_region
          _
        $region16: #{tpu_custom_call.1} parent=11 // pred_fallthru
          _
        // Predicated region
        $region17: #{tpu_custom_call.1} parent=11 // pred_check
          %p182 = pneg %p86
        $region18: #{tpu_custom_call.1} parent=11 // pred_check_branch
          %184 = sbr.rel (%p182) target = $region20
        $region19: #{tpu_custom_call.1} parent=11 // pred_region
          _
        $region20: #{tpu_custom_call.1} parent=11 // pred_fallthru
          _
      $region12: #{tpu_custom_call.1} parent=5 // pred_fallthru
        _
      %p185 = scmp.lt.s32.totalorder %s18, 2
      // Predicated region
      $region21: #{tpu_custom_call.1} parent=5 // pred_check
        %p186 = pneg %p185
      $region22: #{tpu_custom_call.1} parent=5 // pred_check_branch
        %188 = sbr.rel (%p186) target = $region24
      $region23: #{tpu_custom_call.1} parent=5 // pred_region
        // Predicated region
        $region25: #{tpu_custom_call.1} parent=23 // pred_check
          %p189 = pneg %p38
        $region26: #{tpu_custom_call.1} parent=23 // pred_check_branch
          %191 = sbr.rel (%p189) target = $region28
        $region27: #{tpu_custom_call.1} parent=23 // pred_region
          %s192 = smul.u32 9, %s18
          %p193 = scmp.lt.s32.totalorder %s192, 17
          %s194 = scalar_select %p193, %s192, 17
          %s195 = smul.addr %s194, 4
          %s196 = scalar_lea.vmem %s0, %s195
          %s197 = smul.u32 9, %s18
        $region28: #{tpu_custom_call.1} parent=23 // pred_fallthru
          _
      $region24: #{tpu_custom_call.1} parent=5 // pred_fallthru
        _
      %p198 = scmp.le.s32.totalorder 1, %s18
      %p199 = scmp.lt.s32.totalorder %s18, 3
      %p200 = pnand %p198, %p199
      %p201 = pneg %p200
      // Predicated region
      $region29: #{tpu_custom_call.1} parent=5 // pred_check
        _
      $region30: #{tpu_custom_call.1} parent=5 // pred_check_branch
        %203 = sbr.rel (%p200) target = $region32
      $region31: #{tpu_custom_call.1} parent=5 // pred_region
        %s204 = ssub.s32 %s18, 1
        %s205 = smul.u32 9, %s23
        %p206 = scmp.lt.s32.totalorder %s205, 17
        %s207 = scalar_select %p206, %s205, 17
        %s208 = smul.addr %s207, 4
        %s209 = scalar_lea.vmem %s0, %s208
        %p210 = pneg %p44
        %p211 = pneg %p41
        %p212 = pneg %p65
        %p213 = pneg %p62
        %p214 = pneg %p86
        %p215 = pneg %p83
        %p216 = pneg %p112
        %p217 = pneg %p109
        %s218 = smul.u32 6, %s23
        %p219 = scmp.lt.s32.totalorder %s218, 11
        %s220 = scalar_select %p219, %s218, 11
        %s221 = smul.addr %s220, 8
        %s222 = scalar_lea.vmem %s3, %s221
        %p223 = pneg %p138
        %p224 = pneg %p135
        %s225 = sand.u32 %s125, 1
        %s226 = scalar_lea.sflag [#allocation3], %s225
        %s227 = sand.u32 %s125, 1
        %s228 = smul.addr %s227, 8
        %s229 = scalar_lea.vmem [#allocation2], %s228
        %p230 = pneg %p164
        %p231 = pneg %p161
        %s232 = sand.u32 %s151, 1
        %s233 = scalar_lea.sflag [#allocation5], %s232
        %s234 = sand.u32 %s151, 1
        %s235 = smul.addr %s234, 8
        %s236 = scalar_lea.vmem [#allocation4], %s235
        %s237 = smul.u32 9, %s23
        %p238 = scmp.lt.s32.totalorder %s237, 17
        %s239 = scalar_select %p238, %s237, 17
        %s240 = smul.addr %s239, 4
        %s241 = scalar_lea.vmem %s0, %s240
        %s242 = smul.u32 9, %s23
        %s243 = smul.u32 6, %s23
        %p244 = scmp.lt.s32.totalorder %s243, 11
        %s245 = scalar_select %p244, %s243, 11
        %s246 = smul.addr %s245, 8
        %s247 = scalar_lea.vmem %s3, %s246
        %s248 = smul.u32 6, %s23
        %v250 = vld [vmem:[%s241] sm:$0xf]
        %v251 = vld [vmem:[%s241 + $0x4] sm:$0xf]
        %v252 = vld [vmem:[%s241 + $0x8] sm:$0xf]
        %v253 = vld [vmem:[%s241 + $0xc] sm:$0xf]
        %v254 = vld [vmem:[%s241 + $0x10] sm:$0xf]
        %v255 = vld [vmem:[%s241 + $0x14] sm:$0xf]
        %v256 = vld [vmem:[%s1] sm:$0xf]
        %v257 = vld [vmem:[%s1 + $0x4] sm:$0xf]
        %v258 = vld [vmem:[%s241 + $0x18] sm:$0x1]
        %s259 = scalar_lea.vmem %s1, 8
        %v260 = vld [vmem:[%s259] sm:$0xf]
        %v261 = vld [vmem:[%s259 + $0x4] sm:$0xf]
        %v269 = vunpack.c.l.b16 %v250
        %v270 = vunpack.c.l.b16 %v251
        %v271 = vunpack.c.l.b16 %v252
        %v272 = vunpack.c.l.b16 %v253
        %v273 = vunpack.c.l.b16 %v254
        %v274 = vunpack.c.l.b16 %v255
        %v275 = vunpack.c.l.b16 %v258
        %v276 = vpack.c.b16 %v270, %v269
        %v277 = vpack.c.b16 %v272, %v271
        %v278 = vpack.c.b16 %v274, %v273
        %v279 = vpack.c.b16 %v275, %v275
        %vm280 = vsmask.f32 7424
        %v282 = vshrl.u32 %v276, 16
        %v284 = vshll.u32 %v276, 16
        %v286 = vrot.slane %v284, 1
        %v287 = vor.u32 %v282, %v286
        %v289 = vshll.u32 %v277, 16
        %v291 = vrot.slane %v289, 1
        %v292 = vsel %vm280, %v287, %v291
        %v293 = vshrl.u32 %v277, 16
        %v295 = vor.u32 %v293, %v291
        %v297 = vshll.u32 %v278, 16
        %v299 = vrot.slane %v297, 1
        %v300 = vsel %vm280, %v295, %v299
        %v301 = vshrl.u32 %v278, 16
        %v303 = vor.u32 %v301, %v299
        %v305 = vshll.u32 %v279, 16
        %v307 = vrot.slane %v305, 1
        %v308 = vsel %vm280, %v303, %v307
        %v311 = vunpack.c.l.b16 %v260
        %v312 = vunpack.c.l.b16 %v261
        %v313 = vpack.c.b16 %v312, %v311
        %vm315 = vcmask 130048
        %v317 = vsel %vm315, %v292, 0
        %v320 = vsel %vm315, %v300, 0
        %v323 = vsel %vm315, %v308, 0
        %325 = vmatpush.bf16.msra.mxu0 0
        %326 = vmatpush.bf16.msra.mxu0 0
        %327 = vmatpush.bf16.msra.mxu0 0
        %328 = vmatpush.bf16.msra.mxu0 0
        %329 = vmatpush.bf16.msra.mxu0 0
        %330 = vmatpush.bf16.msra.mxu0 0
        %331 = vmatpush.bf16.msra.mxu0 0
        %332 = vmatpush.bf16.msra.mxu0 %v313
        %333 = vmatmul.bf16.gmra.mxu0 %v317
        %v334 = vpop.f32.mrf.mxu0
        %v335 = vadd.f32 0.0, %v334
        %v336 = vpop.f32.mrf.mxu0
        %v337 = vadd.f32 0.0, %v336
        %338 = vmatmul.bf16.gmra.mxu0 %v320
        %v339 = vpop.f32.mrf.mxu0
        %v340 = vadd.f32 0.0, %v339
        %v341 = vpop.f32.mrf.mxu0
        %v342 = vadd.f32 0.0, %v341
        %343 = vmatmul.bf16.gmra.mxu0 %v323
        %v344 = vpop.f32.mrf.mxu0
        %v345 = vadd.f32 0.0, %v344
        %v346 = vpop.f32.mrf.mxu0
        %v347 = vadd.f32 0.0, %v346
        %348 = vdwg.mxu0
        %v351 = vunpack.c.l.b16 %v256
        %v352 = vunpack.c.l.b16 %v257
        %v353 = vpack.c.b16 %v352, %v351
        %v355 = vsel %vm315, %v276, 0
        %v357 = vsel %vm315, %v277, 0
        %v359 = vsel %vm315, %v278, 0
        %361 = vmatpush.bf16.msra.mxu0 0
        %362 = vmatpush.bf16.msra.mxu0 0
        %363 = vmatpush.bf16.msra.mxu0 0
        %364 = vmatpush.bf16.msra.mxu0 0
        %365 = vmatpush.bf16.msra.mxu0 0
        %366 = vmatpush.bf16.msra.mxu0 0
        %367 = vmatpush.bf16.msra.mxu0 0
        %368 = vmatpush.bf16.msra.mxu0 %v353
        %369 = vmatmul.bf16.gmra.mxu0 %v355
        %v370 = vpop.f32.mrf.mxu0
        %v371 = vadd.f32 %v335, %v370
        %v372 = vpop.f32.mrf.mxu0
        %v373 = vadd.f32 %v337, %v372
        %374 = vmatmul.bf16.gmra.mxu0 %v357
        %v375 = vpop.f32.mrf.mxu0
        %v376 = vadd.f32 %v340, %v375
        %v377 = vpop.f32.mrf.mxu0
        %v378 = vadd.f32 %v342, %v377
        %379 = vmatmul.bf16.gmra.mxu0 %v359
        %v380 = vpop.f32.mrf.mxu0
        %v381 = vadd.f32 %v345, %v380
        %v382 = vpop.f32.mrf.mxu0
        %v383 = vadd.f32 %v347, %v382
        %384 = vdwg.mxu0
        %v385 = vld [vmem:[%s241] sm:$0xe]
        %s386 = scalar_lea.vmem %s1, 16
        %v387 = vld [vmem:[%s386] sm:$0xf]
        %v388 = vld [vmem:[%s386 + $0x4] sm:$0xf]
        %v390 = vunpack.c.l.b16 %v385
        %v391 = vpack.c.b16 %v270, %v390
        %vm392 = vcmask 1046528
        %v393 = vrot.slane %v391, 1
        %v394 = vrot.slane %v277, 1
        %v395 = vsel %vm392, %v393, %v394
        %v396 = vrot.slane %v278, 1
        %v397 = vsel %vm392, %v394, %v396
        %v398 = vrot.slane %v279, 1
        %v399 = vsel %vm392, %v396, %v398
        %v402 = vunpack.c.l.b16 %v387
        %v403 = vunpack.c.l.b16 %v388
        %v404 = vpack.c.b16 %v403, %v402
        %v407 = vsel %vm315, %v395, 0
        %v410 = vsel %vm315, %v397, 0
        %v413 = vsel %vm315, %v399, 0
        %415 = vmatpush.bf16.msra.mxu0 0
        %416 = vmatpush.bf16.msra.mxu0 0
        %417 = vmatpush.bf16.msra.mxu0 0
        %418 = vmatpush.bf16.msra.mxu0 0
        %419 = vmatpush.bf16.msra.mxu0 0
        %420 = vmatpush.bf16.msra.mxu0 0
        %421 = vmatpush.bf16.msra.mxu0 0
        %422 = vmatpush.bf16.msra.mxu0 %v404
        %423 = vmatmul.bf16.gmra.mxu0 %v407
        %v424 = vpop.f32.mrf.mxu0
        %v425 = vadd.f32 0.0, %v424
        %v426 = vpop.f32.mrf.mxu0
        %v427 = vadd.f32 0.0, %v426
        %428 = vmatmul.bf16.gmra.mxu0 %v410
        %v429 = vpop.f32.mrf.mxu0
        %v430 = vadd.f32 0.0, %v429
        %v431 = vpop.f32.mrf.mxu0
        %v432 = vadd.f32 0.0, %v431
        %433 = vmatmul.bf16.gmra.mxu0 %v413
        %v434 = vpop.f32.mrf.mxu0
        %v435 = vadd.f32 0.0, %v434
        %v436 = vpop.f32.mrf.mxu0
        %v437 = vadd.f32 0.0, %v436
        %438 = vdwg.mxu0
        %v439 = vadd.f32 %v371, %v425
        %v440 = vadd.f32 %v373, %v427
        %v441 = vadd.f32 %v376, %v430
        %v442 = vadd.f32 %v378, %v432
        %v443 = vadd.f32 %v381, %v435
        %v444 = vadd.f32 %v383, %v437
        %v445 = vld [vmem:[%s241 + $0x18] sm:$0xf]
        %s446 = scalar_lea.vmem %s1, 24
        %v447 = vld [vmem:[%s446] sm:$0xf]
        %v448 = vld [vmem:[%s446 + $0x4] sm:$0xf]
        %v450 = vunpack.c.l.b16 %v445
        %v451 = vpack.c.b16 %v271, %v270
        %v452 = vpack.c.b16 %v273, %v272
        %v453 = vpack.c.b16 %v450, %v274
        %v456 = vunpack.c.l.b16 %v447
        %v457 = vunpack.c.l.b16 %v448
        %v458 = vpack.c.b16 %v457, %v456
        %v461 = vsel %vm315, %v451, 0
        %v464 = vsel %vm315, %v452, 0
        %v467 = vsel %vm315, %v453, 0
        %469 = vmatpush.bf16.msra.mxu0 0
        %470 = vmatpush.bf16.msra.mxu0 0
        %471 = vmatpush.bf16.msra.mxu0 0
        %472 = vmatpush.bf16.msra.mxu0 0
        %473 = vmatpush.bf16.msra.mxu0 0
        %474 = vmatpush.bf16.msra.mxu0 0
        %475 = vmatpush.bf16.msra.mxu0 0
        %476 = vmatpush.bf16.msra.mxu0 %v458
        %477 = vmatmul.bf16.gmra.mxu0 %v461
        %v478 = vpop.f32.mrf.mxu0
        %v479 = vadd.f32 0.0, %v478
        %v480 = vpop.f32.mrf.mxu0
        %v481 = vadd.f32 0.0, %v480
        %482 = vmatmul.bf16.gmra.mxu0 %v464
        %v483 = vpop.f32.mrf.mxu0
        %v484 = vadd.f32 0.0, %v483
        %v485 = vpop.f32.mrf.mxu0
        %v486 = vadd.f32 0.0, %v485
        %487 = vmatmul.bf16.gmra.mxu0 %v467
        %v488 = vpop.f32.mrf.mxu0
        %v489 = vadd.f32 0.0, %v488
        %v490 = vpop.f32.mrf.mxu0
        %v491 = vadd.f32 0.0, %v490
        %492 = vdwg.mxu0
        %v493 = vadd.f32 %v439, %v479
        %v494 = vadd.f32 %v440, %v481
        %v495 = vadd.f32 %v441, %v484
        %v496 = vadd.f32 %v442, %v486
        %v497 = vadd.f32 %v443, %v489
        %v498 = vadd.f32 %v444, %v491
        %v499 = vld [vmem:[%s241 + $0x4] sm:$0xf]
        %v500 = vld [vmem:[%s241 + $0x8] sm:$0xf]
        %v501 = vld [vmem:[%s241 + $0xc] sm:$0xf]
        %v502 = vld [vmem:[%s241 + $0x10] sm:$0xf]
        %v503 = vld [vmem:[%s241 + $0x14] sm:$0xf]
        %v504 = vld [vmem:[%s241 + $0x18] sm:$0xf]
        %v505 = vld [vmem:[%s241 + $0x1c] sm:$0x1]
        %s506 = scalar_lea.vmem %s1, 32
        %v507 = vld [vmem:[%s506] sm:$0xf]
        %v508 = vld [vmem:[%s506 + $0x4] sm:$0xf]
        %v516 = vunpack.c.l.b16 %v499
        %v517 = vunpack.c.l.b16 %v500
        %v518 = vunpack.c.l.b16 %v501
        %v519 = vunpack.c.l.b16 %v502
        %v520 = vunpack.c.l.b16 %v503
        %v521 = vunpack.c.l.b16 %v504
        %v522 = vunpack.c.l.b16 %v505
        %v523 = vpack.c.b16 %v517, %v516
        %v524 = vpack.c.b16 %v519, %v518
        %v525 = vpack.c.b16 %v521, %v520
        %v526 = vpack.c.b16 %v522, %v522
        %v528 = vshrl.u32 %v523, 16
        %v530 = vshll.u32 %v523, 16
        %v532 = vrot.slane %v530, 1
        %v533 = vor.u32 %v528, %v532
        %v535 = vshll.u32 %v524, 16
        %v537 = vrot.slane %v535, 1
        %v538 = vsel %vm280, %v533, %v537
        %v539 = vshrl.u32 %v524, 16
        %v541 = vor.u32 %v539, %v537
        %v543 = vshll.u32 %v525, 16
        %v545 = vrot.slane %v543, 1
        %v546 = vsel %vm280, %v541, %v545
        %v547 = vshrl.u32 %v525, 16
        %v549 = vor.u32 %v547, %v545
        %v551 = vshll.u32 %v526, 16
        %v553 = vrot.slane %v551, 1
        %v554 = vsel %vm280, %v549, %v553
        %v557 = vunpack.c.l.b16 %v507
        %v558 = vunpack.c.l.b16 %v508
        %v559 = vpack.c.b16 %v558, %v557
        %v562 = vsel %vm315, %v538, 0
        %v565 = vsel %vm315, %v546, 0
        %v568 = vsel %vm315, %v554, 0
        %570 = vmatpush.bf16.msra.mxu0 0
        %571 = vmatpush.bf16.msra.mxu0 0
        %572 = vmatpush.bf16.msra.mxu0 0
        %573 = vmatpush.bf16.msra.mxu0 0
        %574 = vmatpush.bf16.msra.mxu0 0
        %575 = vmatpush.bf16.msra.mxu0 0
        %576 = vmatpush.bf16.msra.mxu0 0
        %577 = vmatpush.bf16.msra.mxu0 %v559
        %578 = vmatmul.bf16.gmra.mxu0 %v562
        %v579 = vpop.f32.mrf.mxu0
        %v580 = vadd.f32 0.0, %v579
        %v581 = vpop.f32.mrf.mxu0
        %v582 = vadd.f32 0.0, %v581
        %583 = vmatmul.bf16.gmra.mxu0 %v565
        %v584 = vpop.f32.mrf.mxu0
        %v585 = vadd.f32 0.0, %v584
        %v586 = vpop.f32.mrf.mxu0
        %v587 = vadd.f32 0.0, %v586
        %588 = vmatmul.bf16.gmra.mxu0 %v568
        %v589 = vpop.f32.mrf.mxu0
        %v590 = vadd.f32 0.0, %v589
        %v591 = vpop.f32.mrf.mxu0
        %v592 = vadd.f32 0.0, %v591
        %593 = vdwg.mxu0
        %v594 = vadd.f32 %v493, %v580
        %v595 = vadd.f32 %v494, %v582
        %v596 = vadd.f32 %v495, %v585
        %v597 = vadd.f32 %v496, %v587
        %v598 = vadd.f32 %v497, %v590
        %v599 = vadd.f32 %v498, %v592
        %v600 = vld [vmem:[%s241 + $0x4] sm:$0xe]
        %s601 = scalar_lea.vmem %s1, 40
        %v602 = vld [vmem:[%s601] sm:$0xf]
        %v603 = vld [vmem:[%s601 + $0x4] sm:$0xf]
        %v605 = vunpack.c.l.b16 %v600
        %v606 = vpack.c.b16 %v517, %v605
        %v607 = vrot.slane %v606, 1
        %v608 = vrot.slane %v524, 1
        %v609 = vsel %vm392, %v607, %v608
        %v610 = vrot.slane %v525, 1
        %v611 = vsel %vm392, %v608, %v610
        %v612 = vrot.slane %v526, 1
        %v613 = vsel %vm392, %v610, %v612
        %v616 = vunpack.c.l.b16 %v602
        %v617 = vunpack.c.l.b16 %v603
        %v618 = vpack.c.b16 %v617, %v616
        %v621 = vsel %vm315, %v609, 0
        %v624 = vsel %vm315, %v611, 0
        %v627 = vsel %vm315, %v613, 0
        %629 = vmatpush.bf16.msra.mxu0 0
        %630 = vmatpush.bf16.msra.mxu0 0
        %631 = vmatpush.bf16.msra.mxu0 0
        %632 = vmatpush.bf16.msra.mxu0 0
        %633 = vmatpush.bf16.msra.mxu0 0
        %634 = vmatpush.bf16.msra.mxu0 0
        %635 = vmatpush.bf16.msra.mxu0 0
        %636 = vmatpush.bf16.msra.mxu0 %v618
        %637 = vmatmul.bf16.gmra.mxu0 %v621
        %v638 = vpop.f32.mrf.mxu0
        %v639 = vadd.f32 0.0, %v638
        %v640 = vpop.f32.mrf.mxu0
        %v641 = vadd.f32 0.0, %v640
        %642 = vmatmul.bf16.gmra.mxu0 %v624
        %v643 = vpop.f32.mrf.mxu0
        %v644 = vadd.f32 0.0, %v643
        %v645 = vpop.f32.mrf.mxu0
        %v646 = vadd.f32 0.0, %v645
        %647 = vmatmul.bf16.gmra.mxu0 %v627
        %v648 = vpop.f32.mrf.mxu0
        %v649 = vadd.f32 0.0, %v648
        %v650 = vpop.f32.mrf.mxu0
        %v651 = vadd.f32 0.0, %v650
        %652 = vdwg.mxu0
        %v653 = vadd.f32 %v594, %v639
        %v654 = vadd.f32 %v595, %v641
        %v655 = vadd.f32 %v596, %v644
        %v656 = vadd.f32 %v597, %v646
        %v657 = vadd.f32 %v598, %v649
        %v658 = vadd.f32 %v599, %v651
        %v659 = vld [vmem:[%s241 + $0x1c] sm:$0xf]
        %s660 = scalar_lea.vmem %s1, 48
        %v661 = vld [vmem:[%s660] sm:$0xf]
        %v662 = vld [vmem:[%s660 + $0x4] sm:$0xf]
        %v664 = vunpack.c.l.b16 %v659
        %v665 = vpack.c.b16 %v518, %v517
        %v666 = vpack.c.b16 %v520, %v519
        %v667 = vpack.c.b16 %v664, %v521
        %v670 = vunpack.c.l.b16 %v661
        %v671 = vunpack.c.l.b16 %v662
        %v672 = vpack.c.b16 %v671, %v670
        %v675 = vsel %vm315, %v665, 0
        %v678 = vsel %vm315, %v666, 0
        %v681 = vsel %vm315, %v667, 0
        %683 = vmatpush.bf16.msra.mxu0 0
        %684 = vmatpush.bf16.msra.mxu0 0
        %685 = vmatpush.bf16.msra.mxu0 0
        %686 = vmatpush.bf16.msra.mxu0 0
        %687 = vmatpush.bf16.msra.mxu0 0
        %688 = vmatpush.bf16.msra.mxu0 0
        %689 = vmatpush.bf16.msra.mxu0 0
        %690 = vmatpush.bf16.msra.mxu0 %v672
        %691 = vmatmul.bf16.gmra.mxu0 %v675
        %v692 = vpop.f32.mrf.mxu0
        %v693 = vadd.f32 0.0, %v692
        %v694 = vpop.f32.mrf.mxu0
        %v695 = vadd.f32 0.0, %v694
        %696 = vmatmul.bf16.gmra.mxu0 %v678
        %v697 = vpop.f32.mrf.mxu0
        %v698 = vadd.f32 0.0, %v697
        %v699 = vpop.f32.mrf.mxu0
        %v700 = vadd.f32 0.0, %v699
        %701 = vmatmul.bf16.gmra.mxu0 %v681
        %v702 = vpop.f32.mrf.mxu0
        %v703 = vadd.f32 0.0, %v702
        %v704 = vpop.f32.mrf.mxu0
        %v705 = vadd.f32 0.0, %v704
        %706 = vdwg.mxu0
        %v707 = vadd.f32 %v653, %v693
        %v708 = vadd.f32 %v654, %v695
        %v709 = vadd.f32 %v655, %v698
        %v710 = vadd.f32 %v656, %v700
        %v711 = vadd.f32 %v657, %v703
        %v712 = vadd.f32 %v658, %v705
        %v713 = vld [vmem:[%s241 + $0x8] sm:$0xf]
        %v714 = vld [vmem:[%s241 + $0xc] sm:$0xf]
        %v715 = vld [vmem:[%s241 + $0x10] sm:$0xf]
        %v716 = vld [vmem:[%s241 + $0x14] sm:$0xf]
        %v717 = vld [vmem:[%s241 + $0x18] sm:$0xf]
        %v718 = vld [vmem:[%s241 + $0x1c] sm:$0xf]
        %v719 = vld [vmem:[%s241 + $0x20] sm:$0x1]
        %s720 = scalar_lea.vmem %s1, 56
        %v721 = vld [vmem:[%s720] sm:$0xf]
        %v722 = vld [vmem:[%s720 + $0x4] sm:$0xf]
        %v730 = vunpack.c.l.b16 %v713
        %v731 = vunpack.c.l.b16 %v714
        %v732 = vunpack.c.l.b16 %v715
        %v733 = vunpack.c.l.b16 %v716
        %v734 = vunpack.c.l.b16 %v717
        %v735 = vunpack.c.l.b16 %v718
        %v736 = vunpack.c.l.b16 %v719
        %v737 = vpack.c.b16 %v731, %v730
        %v738 = vpack.c.b16 %v733, %v732
        %v739 = vpack.c.b16 %v735, %v734
        %v740 = vpack.c.b16 %v736, %v736
        %v742 = vshrl.u32 %v737, 16
        %v744 = vshll.u32 %v737, 16
        %v746 = vrot.slane %v744, 1
        %v747 = vor.u32 %v742, %v746
        %v749 = vshll.u32 %v738, 16
        %v751 = vrot.slane %v749, 1
        %v752 = vsel %vm280, %v747, %v751
        %v753 = vshrl.u32 %v738, 16
        %v755 = vor.u32 %v753, %v751
        %v757 = vshll.u32 %v739, 16
        %v759 = vrot.slane %v757, 1
        %v760 = vsel %vm280, %v755, %v759
        %v761 = vshrl.u32 %v739, 16
        %v763 = vor.u32 %v761, %v759
        %v765 = vshll.u32 %v740, 16
        %v767 = vrot.slane %v765, 1
        %v768 = vsel %vm280, %v763, %v767
        %v771 = vunpack.c.l.b16 %v721
        %v772 = vunpack.c.l.b16 %v722
        %v773 = vpack.c.b16 %v772, %v771
        %v776 = vsel %vm315, %v752, 0
        %v779 = vsel %vm315, %v760, 0
        %v782 = vsel %vm315, %v768, 0
        %784 = vmatpush.bf16.msra.mxu0 0
        %785 = vmatpush.bf16.msra.mxu0 0
        %786 = vmatpush.bf16.msra.mxu0 0
        %787 = vmatpush.bf16.msra.mxu0 0
        %788 = vmatpush.bf16.msra.mxu0 0
        %789 = vmatpush.bf16.msra.mxu0 0
        %790 = vmatpush.bf16.msra.mxu0 0
        %791 = vmatpush.bf16.msra.mxu0 %v773
        %792 = vmatmul.bf16.gmra.mxu0 %v776
        %v793 = vpop.f32.mrf.mxu0
        %v794 = vadd.f32 0.0, %v793
        %v795 = vpop.f32.mrf.mxu0
        %v796 = vadd.f32 0.0, %v795
        %797 = vmatmul.bf16.gmra.mxu0 %v779
        %v798 = vpop.f32.mrf.mxu0
        %v799 = vadd.f32 0.0, %v798
        %v800 = vpop.f32.mrf.mxu0
        %v801 = vadd.f32 0.0, %v800
        %802 = vmatmul.bf16.gmra.mxu0 %v782
        %v803 = vpop.f32.mrf.mxu0
        %v804 = vadd.f32 0.0, %v803
        %v805 = vpop.f32.mrf.mxu0
        %v806 = vadd.f32 0.0, %v805
        %807 = vdwg.mxu0
        %v808 = vadd.f32 %v707, %v794
        %v809 = vadd.f32 %v708, %v796
        %v810 = vadd.f32 %v709, %v799
        %v811 = vadd.f32 %v710, %v801
        %v812 = vadd.f32 %v711, %v804
        %v813 = vadd.f32 %v712, %v806
        %v814 = vld [vmem:[%s241 + $0x8] sm:$0xe]
        %s815 = scalar_lea.vmem %s1, 64
        %v816 = vld [vmem:[%s815] sm:$0xf]
        %v817 = vld [vmem:[%s815 + $0x4] sm:$0xf]
        %v819 = vunpack.c.l.b16 %v814
        %v820 = vpack.c.b16 %v731, %v819
        %v821 = vrot.slane %v820, 1
        %v822 = vrot.slane %v738, 1
        %v823 = vsel %vm392, %v821, %v822
        %v824 = vrot.slane %v739, 1
        %v825 = vsel %vm392, %v822, %v824
        %v826 = vrot.slane %v740, 1
        %v827 = vsel %vm392, %v824, %v826
        %v830 = vunpack.c.l.b16 %v816
        %v831 = vunpack.c.l.b16 %v817
        %v832 = vpack.c.b16 %v831, %v830
        %v835 = vsel %vm315, %v823, 0
        %v838 = vsel %vm315, %v825, 0
        %v841 = vsel %vm315, %v827, 0
        %843 = vmatpush.bf16.msra.mxu0 0
        %844 = vmatpush.bf16.msra.mxu0 0
        %845 = vmatpush.bf16.msra.mxu0 0
        %846 = vmatpush.bf16.msra.mxu0 0
        %847 = vmatpush.bf16.msra.mxu0 0
        %848 = vmatpush.bf16.msra.mxu0 0
        %849 = vmatpush.bf16.msra.mxu0 0
        %850 = vmatpush.bf16.msra.mxu0 %v832
        %851 = vmatmul.bf16.gmra.mxu0 %v835
        %v852 = vpop.f32.mrf.mxu0
        %v853 = vadd.f32 0.0, %v852
        %v854 = vpop.f32.mrf.mxu0
        %v855 = vadd.f32 0.0, %v854
        %856 = vmatmul.bf16.gmra.mxu0 %v838
        %v857 = vpop.f32.mrf.mxu0
        %v858 = vadd.f32 0.0, %v857
        %v859 = vpop.f32.mrf.mxu0
        %v860 = vadd.f32 0.0, %v859
        %861 = vmatmul.bf16.gmra.mxu0 %v841
        %v862 = vpop.f32.mrf.mxu0
        %v863 = vadd.f32 0.0, %v862
        %v864 = vpop.f32.mrf.mxu0
        %v865 = vadd.f32 0.0, %v864
        %866 = vdwg.mxu0
        %v867 = vadd.f32 %v808, %v853
        %v868 = vadd.f32 %v809, %v855
        %v869 = vadd.f32 %v810, %v858
        %v870 = vadd.f32 %v811, %v860
        %v871 = vadd.f32 %v812, %v863
        %v872 = vadd.f32 %v813, %v865
        %vm873 = vcmask 195584
        %874 = vst.msk [vmem:[%s247] sm:$0xff] %vm873, %v867
        %875 = vst.msk [vmem:[%s247 + $0x8] sm:$0xff] %vm873, %v868
        %876 = vst.msk [vmem:[%s247 + $0x10] sm:$0xff] %vm873, %v869
        %877 = vst.msk [vmem:[%s247 + $0x18] sm:$0xff] %vm873, %v870
        %878 = vst.msk [vmem:[%s247 + $0x20] sm:$0xff] %vm873, %v871
        %879 = vst.msk [vmem:[%s247 + $0x28] sm:$0xff] %vm873, %v872
        %v880 = vld [vmem:[%s2] sm:$0xff]
        %v881 = vld [vmem:[%s2 + $0x8] sm:$0xff]
        %v882 = vld [vmem:[%s2 + $0x10] sm:$0xff]
        %v883 = vld [vmem:[%s2 + $0x18] sm:$0xff]
        %v884 = vld [vmem:[%s2 + $0x20] sm:$0xff]
        %v885 = vld [vmem:[%s2 + $0x28] sm:$0xff]
        %887 = vset.pattern.permute.xlu0 0
        %888 = vperm.xlu0 %887, %v880
        %v889 = vpop.permute.xlu0 %888
        %892 = vset.pattern.permute.xlu0 0
        %893 = vperm.xlu0 %892, %v881
        %v894 = vpop.permute.xlu0 %893
        %897 = vset.pattern.permute.xlu0 0
        %898 = vperm.xlu0 %897, %v882
        %v899 = vpop.permute.xlu0 %898
        %902 = vset.pattern.permute.xlu0 0
        %903 = vperm.xlu0 %902, %v883
        %v904 = vpop.permute.xlu0 %903
        %907 = vset.pattern.permute.xlu0 0
        %908 = vperm.xlu0 %907, %v884
        %v909 = vpop.permute.xlu0 %908
        %912 = vset.pattern.permute.xlu0 0
        %913 = vperm.xlu0 %912, %v885
        %v914 = vpop.permute.xlu0 %913
        %v916 = vmul.f32 %v867, %v889
        %v917 = vmul.f32 %v868, %v894
        %v918 = vmul.f32 %v869, %v899
        %v919 = vmul.f32 %v870, %v904
        %v920 = vmul.f32 %v871, %v909
        %v921 = vmul.f32 %v872, %v914
        %v922 = vsel %vm873, %v916, 0.0
        %v923 = vsel %vm873, %v917, 0.0
        %v924 = vadd.f32 %v922, %v923
        %v925 = vsel %vm873, %v918, 0.0
        %v926 = vadd.f32 %v924, %v925
        %v927 = vsel %vm873, %v919, 0.0
        %v928 = vadd.f32 %v926, %v927
        %v929 = vsel %vm873, %v920, 0.0
        %v930 = vadd.f32 %v928, %v929
        %v931 = vsel %vm873, %v921, 0.0
        %v932 = vadd.f32 %v930, %v931
        %933 = vst.msk [vmem:[%s229] sm:$0xff] %vm873, %v932
        %v934 = vmul.f32 %v916, %v916
        %v935 = vmul.f32 %v917, %v917
        %v936 = vmul.f32 %v918, %v918
        %v937 = vmul.f32 %v919, %v919
        %v938 = vmul.f32 %v920, %v920
        %v939 = vmul.f32 %v921, %v921
        %v940 = vsel %vm873, %v934, 0.0
        %v941 = vsel %vm873, %v935, 0.0
        %v942 = vadd.f32 %v940, %v941
        %v943 = vsel %vm873, %v936, 0.0
        %v944 = vadd.f32 %v942, %v943
        %v945 = vsel %vm873, %v937, 0.0
        %v946 = vadd.f32 %v944, %v945
        %v947 = vsel %vm873, %v938, 0.0
        %v948 = vadd.f32 %v946, %v947
        %v949 = vsel %vm873, %v939, 0.0
        %v950 = vadd.f32 %v948, %v949
        %951 = vst.msk [vmem:[%s236] sm:$0xff] %vm873, %v950
        %s952 = smul.u32 6, %s23
        %p953 = scmp.lt.s32.totalorder %s952, 11
        %s954 = scalar_select %p953, %s952, 11
        %s955 = smul.addr %s954, 8
        %s956 = scalar_lea.vmem %s3, %s955
        %s957 = sand.u32 %s125, 1
        %s958 = scalar_lea.sflag [#allocation3], %s957
        %s959 = sand.u32 %s125, 1
        %s960 = smul.addr %s959, 8
        %s961 = scalar_lea.vmem [#allocation2], %s960
        %s962 = sand.u32 %s151, 1
        %s963 = scalar_lea.sflag [#allocation5], %s962
        %s964 = sand.u32 %s151, 1
        %s965 = smul.addr %s964, 8
        %s966 = scalar_lea.vmem [#allocation4], %s965
        // Predicated region
        $region33: #{tpu_custom_call.1} parent=31 // pred_check
          %p967 = pneg %p109
        $region34: #{tpu_custom_call.1} parent=31 // pred_check_branch
          %969 = sbr.rel (%p967) target = $region36
        $region35: #{tpu_custom_call.1} parent=31 // pred_region
          %s970 = smul.u32 6, %s23
        $region36: #{tpu_custom_call.1} parent=31 // pred_fallthru
          _
        // Predicated region
        $region37: #{tpu_custom_call.1} parent=31 // pred_check
          %p971 = pneg %p135
        $region38: #{tpu_custom_call.1} parent=31 // pred_check_branch
          %973 = sbr.rel (%p971) target = $region40
        $region39: #{tpu_custom_call.1} parent=31 // pred_region
          %975 = vsyncadd %s958, 0
          %s976 = smul.addr %s23, 8
          %s977 = scalar_lea.hbm %s4, %s976
          %s979 = sshll.u32 %s961, 4
          %s980 = int_to_ptr.vmem [resolvable:$true] %s979
          %s981 = sshll.u32 %s977, 4
          %s982 = int_to_ptr.hbm [resolvable:$true] %s981
          %984 = dma.vmem_to_hbm [thread:$0]  %s980, 128, %s982, %s958
        $region40: #{tpu_custom_call.1} parent=31 // pred_fallthru
          _
        // Predicated region
        $region41: #{tpu_custom_call.1} parent=31 // pred_check
          %p985 = pneg %p161
        $region42: #{tpu_custom_call.1} parent=31 // pred_check_branch
          %987 = sbr.rel (%p985) target = $region44
        $region43: #{tpu_custom_call.1} parent=31 // pred_region
          %989 = vsyncadd %s963, 0
          %s990 = smul.addr %s23, 8
          %s991 = scalar_lea.hbm %s5, %s990
          %s993 = sshll.u32 %s966, 4
          %s994 = int_to_ptr.vmem [resolvable:$true] %s993
          %s995 = sshll.u32 %s991, 4
          %s996 = int_to_ptr.hbm [resolvable:$true] %s995
          %998 = dma.vmem_to_hbm [thread:$0]  %s994, 128, %s996, %s963
        $region44: #{tpu_custom_call.1} parent=31 // pred_fallthru
          _
      $region32: #{tpu_custom_call.1} parent=5 // pred_fallthru
        _
      %p999 = scmp.le.s32.totalorder 2, %s18
      // Predicated region
      $region45: #{tpu_custom_call.1} parent=5 // pred_check
        %p1000 = pneg %p999
      $region46: #{tpu_custom_call.1} parent=5 // pred_check_branch
        %1002 = sbr.rel (%p1000) target = $region48
      $region47: #{tpu_custom_call.1} parent=5 // pred_region
        %s1003 = ssub.s32 %s18, 2
        // Predicated region
        $region49: #{tpu_custom_call.1} parent=47 // pred_check
          %p1004 = pneg %p115
        $region50: #{tpu_custom_call.1} parent=47 // pred_check_branch
          %1006 = sbr.rel (%p1004) target = $region52
        $region51: #{tpu_custom_call.1} parent=47 // pred_region
          %s1007 = smul.u32 6, %s24
          %p1008 = scmp.lt.s32.totalorder %s1007, 11
          %s1009 = scalar_select %p1008, %s1007, 11
          %s1010 = smul.addr %s1009, 8
          %s1011 = scalar_lea.vmem %s3, %s1010
        $region52: #{tpu_custom_call.1} parent=47 // pred_fallthru
          _
        // Predicated region
        $region53: #{tpu_custom_call.1} parent=47 // pred_check
          %p1012 = pneg %p141
        $region54: #{tpu_custom_call.1} parent=47 // pred_check_branch
          %1014 = sbr.rel (%p1012) target = $region56
        $region55: #{tpu_custom_call.1} parent=47 // pred_region
          %s1015 = sand.u32 %s126, 1
          %s1016 = scalar_lea.sflag [#allocation3], %s1015
          %s1017 = sand.u32 %s126, 1
          %s1018 = smul.addr %s1017, 8
          %s1019 = scalar_lea.vmem [#allocation2], %s1018
          %1021 = dma.done %s1016, 128
        $region56: #{tpu_custom_call.1} parent=47 // pred_fallthru
          _
        // Predicated region
        $region57: #{tpu_custom_call.1} parent=47 // pred_check
          %p1022 = pneg %p167
        $region58: #{tpu_custom_call.1} parent=47 // pred_check_branch
          %1024 = sbr.rel (%p1022) target = $region60
        $region59: #{tpu_custom_call.1} parent=47 // pred_region
          %s1025 = sand.u32 %s152, 1
          %s1026 = scalar_lea.sflag [#allocation5], %s1025
          %s1027 = sand.u32 %s152, 1
          %s1028 = smul.addr %s1027, 8
          %s1029 = scalar_lea.vmem [#allocation4], %s1028
          %1031 = dma.done %s1026, 128
        $region60: #{tpu_custom_call.1} parent=47 // pred_fallthru
          _
      $region48: #{tpu_custom_call.1} parent=5 // pred_fallthru
        _
    $region6: #{tpu_custom_call.1} parent=1 // loop_footer
      %s22 = sadd.s32 1, %s18
    $region7: #{tpu_custom_call.1} parent=1 // loop_footer_branch
      %17 = sbr.rel target = $region3
    $region8: #{tpu_custom_call.1} parent=1 // loop_exit
      _
    %1032 = vsyncpa [#allocation3], 1
    %s1033 = scalar_lea.sflag [#allocation3], 1
    %1034 = vsyncpa %s1033, 1
    %1035 = vsyncpa [#allocation5], 1
    %s1036 = scalar_lea.sflag [#allocation5], 1
    %1037 = vsyncpa %s1036, 1

</llo_original>
